<compile_context>
chip_gen: v6e
topology: v6e:2x2x1
jax: 0.10.0
libtpu: 0.0.40
codegen_flags: <defaults>
</compile_context>

<pallas_src>
import functools

import jax
import jax.numpy as jnp
from jax.experimental import pallas as pl
from jax.experimental.pallas import tpu as pltpu


_TARGET_IN_BLOCK_BYTES = 2 * 1024 * 1024   # ~2 MiB blocks already reach ~85% of HBM roofline

# Cleared at runtime if the local-DMA pass-through variant fails to lower on this chip.
_LOCAL_DMA_OK = True


@functools.lru_cache(maxsize=None)
def _vmem_budget():
    """(block-selection budget, vmem_limit_bytes), generation aware."""
    try:
        cap = int(pltpu.get_tpu_info().vmem_capacity_bytes)
    except Exception:
        cap = 64 * 1024 * 1024          # be conservative if the query is unavailable
    if cap >= 100 * 1024 * 1024:        # v5e / v6e: 128 MiB physical VMEM
        return 48 * 1024 * 1024, 64 * 1024 * 1024
    return 20 * 1024 * 1024, 32 * 1024 * 1024   # v7x: 64 MiB physical


def _mbstd_kernel(x_ref, out_ref, part_ref, *dma_sem, group_size, c_hw, use_dma):
    """Fused minibatch-stddev partial reduction + pass-through copy.

    x_ref    : (G, tb, C*H*W)       input tile (grouped view of x)
    out_ref  : (G, tb, (C+1)*H*W)   output tile (grouped view of concat output)
    part_ref : (1, 8, 128) f32      per-grid-step partial sum of per-column stds
    dma_sem  : optional DMA semaphore (only when use_dma)
    """
    x_raw = x_ref[...]                                   # (G, tb, CHW)

    copy = None
    if use_dma:
        # Pass-through copy of x into the first C*H*W lanes of each output row goes
        # through the DMA engine instead of the (binding) vector-store slot.
        copy = pltpu.make_async_copy(
            x_ref, out_ref.at[:, :, pl.ds(0, c_hw)], dma_sem[0])
        copy.start()
    else:
        out_ref[:, :, pl.ds(0, c_hw)] = x_raw.astype(out_ref.dtype)
    # NOTE: the std-channel tail [c_hw, c_hw+hw) is intentionally left unwritten here;
    # it is filled in-place by the wrapper's dynamic_update_slice after the reduction.

    # Group statistics across axis 0 (major axis) -> pure VPU element-wise work.
    x = x_raw.astype(jnp.float32)
    mean = jnp.mean(x, axis=0, keepdims=True)            # (1, tb, CHW)
    diff = x - mean
    # torch .var(dim=0) default is unbiased (divide by G-1).
    var = jnp.sum(diff * diff, axis=0) * (1.0 / (group_size - 1.0))   # (tb, CHW)
    std = jnp.sqrt(var + 1e-8)                           # (tb, CHW)

    # Per-step scalar reduction (XLU + VALU tree, non-binding slots); one vreg store.
    part_ref[...] = jnp.full(part_ref.shape, jnp.sum(std), dtype=jnp.float32)

    if use_dma:
        copy.wait()


def _pick_batch_tile(bg, per_tb_vmem, per_tb_in, budget, min_steps):
    """Largest valid batch tile (multiple of 8 dividing bg, or bg) within budget,
    preferring ~2 MiB input blocks and >= min_steps grid steps."""
    cands = {d for d in range(8, bg + 1, 8) if bg % d == 0}
    cands.add(bg)
    cands = sorted(cands, reverse=True)
    fitting = [tb for tb in cands if tb * per_tb_vmem <= budget]
    if not fitting:
        return None
    preferred = [tb for tb in fitting if tb * per_tb_in <= _TARGET_IN_BLOCK_BYTES]
    if not preferred:
        preferred = [fitting[-1]]
    if min_steps > 1:
        pipelined = [tb for tb in preferred if bg // tb >= min_steps]
        if pipelined:
            return pipelined[0]
        pipelined = [tb for tb in fitting if bg // tb >= min_steps]
        if pipelined:
            return pipelined[0]
    return preferred[0]


@functools.partial(jax.jit, static_argnames=("group_size", "block_b", "use_dma"))
def _mbstd_impl(x, group_size, block_b, use_dma):
    b, c, h, w = x.shape
    assert b % group_size == 0
    g = group_size                       # NOTE: spec module assumes g >= 2 (ddof=1)
    bg = b // g
    hw = h * w
    chw = c * hw
    chw1 = (c + 1) * hw
    n_cols = bg * chw                    # == B*C*H*W // G
    esize = jnp.dtype(x.dtype).itemsize

    budget, vmem_limit = _vmem_budget()
    # Double-buffered in + out blocks per unit of the batch tile (no accumulator).
    per_tb_vmem = 2 * g * chw * esize + 2 * g * chw1 * esize
    per_tb_in = g * chw * esize
    total_in = b * chw * esize

    if block_b is not None:
        assert bg % block_b == 0 and (block_b % 8 == 0 or block_b == bg)
        tb = block_b
    else:
        tb = _pick_batch_tile(bg, per_tb_vmem, per_tb_in, budget,
                              min_steps=3 if total_in > (8 << 20) else 1)

    if tb is None:
        # TODO(synk): fused kernel keeps the full C*H*W row per block; for inputs
        # where even the minimal block exceeds VMEM, fall back to plain JAX.
        grouped = x.reshape(g, -1).astype(jnp.float32)
        var = jnp.var(grouped, axis=0, ddof=1)
        std = jnp.mean(jnp.sqrt(var + 1e-8))
        std_map = jnp.broadcast_to(std, (b, 1, h, w)).astype(x.dtype)
        return jnp.concatenate([x, std_map], axis=1)

    n_steps = bg // tb
    # Grouped view is a free, contiguous reshape (same split as torch .view(G, -1)).
    x3 = x.reshape(g, bg, chw)

    kernel = functools.partial(_mbstd_kernel, group_size=g, c_hw=chw, use_dma=use_dma)
    scratch = [pltpu.SemaphoreType.DMA] if use_dma else []

    cost = pl.CostEstimate(
        flops=int(6 * g * n_cols),
        transcendentals=int(n_cols),
        bytes_accessed=int(x.size * esize + b * chw1 * esize + n_steps * 8 * 128 * 4))

    out3, partials = pl.pallas_call(
        kernel,
        out_shape=(jax.ShapeDtypeStruct((g, bg, chw1), x.dtype),
                   jax.ShapeDtypeStruct((n_steps, 8, 128), jnp.float32)),
        grid_spec=pltpu.PrefetchScalarGridSpec(
            num_scalar_prefetch=0,
            grid=(n_steps,),
            in_specs=[pl.BlockSpec((g, tb, chw), lambda j: (0, j, 0))],
            out_specs=(pl.BlockSpec((g, tb, chw1), lambda j: (0, j, 0)),
                       pl.BlockSpec((1, 8, 128), lambda j: (j, 0, 0))),
            scratch_shapes=scratch,
        ),
        compiler_params=pltpu.CompilerParams(
            # Every grid step writes disjoint output blocks (per-step partials instead
            # of a resident scalar) -> safe to shard across TensorCores.
            dimension_semantics=("parallel",),
            vmem_limit_bytes=vmem_limit),
        cost_estimate=cost,
    )(x3)

    # Combine per-step partials -> global mean of per-column stds.
    std = jnp.sum(partials[:, 0, 0]) * (1.0 / n_cols)

    # (G, Bg, (C+1)*H*W) -> (B, C+1, H, W): row-major order matches torch's view.
    out = out3.reshape(b, c + 1, h, w)
    # Fill the std channel in place (operand has no other uses, so XLA lowers the
    # dynamic_update_slice in place; only B*H*W elements move).
    std_map = jnp.broadcast_to(std.astype(x.dtype), (b, 1, h, w))
    out = jax.lax.dynamic_update_slice(out, std_map, (0, c, 0, 0))
    return out


def minibatch_stddev(x, group_size: int = 4, block_b=None):
    """MiniBatchStdDev.forward: concat(x, mean-of-grouped-std channel)."""
    global _LOCAL_DMA_OK
    _, c, h, w = x.shape
    chw = c * h * w
    # Local VMEM->VMEM DMA pass-through only when the destination window is
    # lane-tile aligned; otherwise (or if lowering is unsupported) use vreg stores.
    if _LOCAL_DMA_OK and (chw % 128 == 0):
        try:
            return _mbstd_impl(x, group_size, block_b, True)
        except Exception:
            _LOCAL_DMA_OK = False
    return _mbstd_impl(x, group_size, block_b, False)


def _reference(x, group_size):
    b, c, h, w = x.shape
    grouped = x.reshape(group_size, -1).astype(jnp.float32)
    var = jnp.var(grouped, axis=0, ddof=1)
    std = jnp.mean(jnp.sqrt(var + 1e-8))
    std_map = jnp.broadcast_to(std, (b, 1, h, w)).astype(x.dtype)
    return jnp.concatenate([x, std_map], axis=1)


if __name__ == "__main__":
    gs = 4
    k1, k2 = jax.random.split(jax.random.PRNGKey(0))

    # Case 1: small shape (scale of the module's actual use site), single grid step.
    x1 = jax.random.normal(k1, (4, 4, 16, 16), dtype=jnp.float32)
    out1 = jax.block_until_ready(minibatch_stddev(x1, group_size=gs))
    ref1 = _reference(x1, gs)
    assert out1.shape == (4, 5, 16, 16) and out1.dtype == x1.dtype
    assert jnp.allclose(out1, ref1, atol=1e-5, rtol=1e-5)

    # Case 2: forced smaller batch tile -> multi-step grid, exercises the per-step
    # partial-sum path and the "parallel" grid axis.
    x2 = jax.random.normal(k2, (64, 2, 8, 8), dtype=jnp.float32)
    out2 = jax.block_until_ready(minibatch_stddev(x2, group_size=gs, block_b=8))
    ref2 = _reference(x2, gs)
    assert out2.shape == (64, 3, 8, 8) and out2.dtype == x2.dtype
    assert jnp.allclose(out2, ref2, atol=1e-5, rtol=1e-5)

    print("KERNEL_OK")
</pallas_src>

<mosaic_0001>
module attributes {stable_mosaic.version = 11 : i64} {
  func.func @_mbstd_kernel(%arg0: i32, %arg1: memref<4x1x1024xf32, #tpu.memory_space<vmem>>, %arg2: memref<4x1x1280xf32, #tpu.memory_space<vmem>>, %arg3: memref<1x8x128xf32, #tpu.memory_space<vmem>>, %arg4: memref<!tpu.dma_semaphore, #tpu.memory_space<semaphore_mem>>) attributes {dimension_semantics = [#tpu.dimension_semantics<parallel>], iteration_bounds = array<i64: 1>, scalar_prefetch = 0 : i64, scratch_operands = 1 : i64, tpu.core_type = #tpu.core_type<tc>, window_params = [{transform_indices = @transform_0, window_bounds = array<i64: 4, 1, 1024>}, {transform_indices = @transform_1, window_bounds = array<i64: 4, 1, 1280>}, {transform_indices = @transform_2, window_bounds = array<i64: 1, 8, 128>}]} {
    %c0 = arith.constant 0 : index
    %c0_0 = arith.constant 0 : index
    %c0_1 = arith.constant 0 : index
    %0 = vector.load %arg1[%c0, %c0_0, %c0_1] : memref<4x1x1024xf32, #tpu.memory_space<vmem>>, vector<4x1x1024xf32>
    %c0_i32 = arith.constant 0 : i32
    %c0_i32_2 = arith.constant 0 : i32
    %c0_i32_3 = arith.constant 0 : i32
    %1 = tpu.memref_slice %arg2[%c0_i32, %c0_i32_2, %c0_i32_3] : memref<4x1x1280xf32, #tpu.memory_space<vmem>> -> memref<4x1x1024xf32, #tpu.memory_space<vmem>>
    tpu.enqueue_dma source(%arg1 : memref<4x1x1024xf32, #tpu.memory_space<vmem>>) target(%1 : memref<4x1x1024xf32, #tpu.memory_space<vmem>>) target_semaphore(%arg4 : memref<!tpu.dma_semaphore, #tpu.memory_space<semaphore_mem>>)
    %cst = arith.constant dense<0.000000e+00> : vector<1x1024xf32>
    %2 = vector.multi_reduction <add>, %0, %cst [0] : vector<4x1x1024xf32> to vector<1x1024xf32>
    %3 = vector.shape_cast %2 : vector<1x1024xf32> to vector<1x1x1024xf32>
    %cst_4 = arith.constant 4.000000e+00 : f32
    %4 = vector.broadcast %cst_4 : f32 to vector<1x1x1024xf32>
    %5 = arith.divf %3, %4 : vector<1x1x1024xf32>
    %6 = vector.broadcast %5 : vector<1x1x1024xf32> to vector<4x1x1024xf32>
    %7 = arith.subf %0, %6 : vector<4x1x1024xf32>
    %8 = arith.mulf %7, %7 : vector<4x1x1024xf32>
    %cst_5 = arith.constant dense<0.000000e+00> : vector<1x1024xf32>
    %9 = vector.multi_reduction <add>, %8, %cst_5 [0] : vector<4x1x1024xf32> to vector<1x1024xf32>
    %cst_6 = arith.constant 0.333333343 : f32
    %10 = vector.broadcast %cst_6 : f32 to vector<1x1024xf32>
    %11 = arith.mulf %9, %10 : vector<1x1024xf32>
    %cst_7 = arith.constant 9.99999993E-9 : f32
    %12 = vector.broadcast %cst_7 : f32 to vector<1x1024xf32>
    %13 = arith.addf %11, %12 : vector<1x1024xf32>
    %14 = math.sqrt %13 : vector<1x1024xf32>
    %15 = vector.shape_cast %14 : vector<1x1024xf32> to vector<1x1x1024xf32>
    %cst_8 = arith.constant dense<0.000000e+00> : vector<1xf32>
    %16 = vector.multi_reduction <add>, %15, %cst_8 [1, 2] : vector<1x1x1024xf32> to vector<1xf32>
    %17 = vector.shape_cast %16 : vector<1xf32> to vector<1x1x1xf32>
    %18 = vector.extract %17[0, 0, 0] : f32 from vector<1x1x1xf32>
    %19 = vector.broadcast %18 : f32 to vector<1x8x128xf32>
    %c0_9 = arith.constant 0 : index
    %c0_10 = arith.constant 0 : index
    %c0_11 = arith.constant 0 : index
    %20 = vector.load %arg3[%c0_9, %c0_10, %c0_11] : memref<1x8x128xf32, #tpu.memory_space<vmem>>, vector<1x8x128xf32>
    tpu.vector_store %arg3[%c0_9, %c0_10, %c0_11], %19 {strides = array<i32>} : memref<1x8x128xf32, #tpu.memory_space<vmem>>, vector<1x8x128xf32>,
    %c0_i32_12 = arith.constant 0 : i32
    %c0_i32_13 = arith.constant 0 : i32
    %c0_i32_14 = arith.constant 0 : i32
    %21 = tpu.memref_slice %arg2[%c0_i32_12, %c0_i32_13, %c0_i32_14] : memref<4x1x1280xf32, #tpu.memory_space<vmem>> -> memref<4x1x1024xf32, #tpu.memory_space<vmem>>
    tpu.wait_dma2 semaphore(%arg4 : memref<!tpu.dma_semaphore, #tpu.memory_space<semaphore_mem>>) src(%arg1 : memref<4x1x1024xf32, #tpu.memory_space<vmem>>) dst(%21 : memref<4x1x1024xf32, #tpu.memory_space<vmem>>)
    return
  }
  func.func @transform_0(%arg0: i32) -> (i32, i32, i32) {
    %c0_i32 = arith.constant 0 : i32
    %c0_i32_0 = arith.constant 0 : i32
    %c0_i32_1 = arith.constant 0 : i32
    return %c0_i32, %arg0, %c0_i32_0 : i32, i32, i32
  }
  func.func @transform_1(%arg0: i32) -> (i32, i32, i32) {
    %c0_i32 = arith.constant 0 : i32
    %c0_i32_0 = arith.constant 0 : i32
    %c0_i32_1 = arith.constant 0 : i32
    return %c0_i32, %arg0, %c0_i32_0 : i32, i32, i32
  }
  func.func @transform_2(%arg0: i32) -> (i32, i32, i32) {
    %c0_i32 = arith.constant 0 : i32
    %c0_i32_0 = arith.constant 0 : i32
    %c0_i32_1 = arith.constant 0 : i32
    return %arg0, %c0_i32, %c0_i32_0 : i32, i32, i32
  }
}

module attributes {stable_mosaic.version = 11 : i64} {
  func.func @_mbstd_kernel(%arg0: i32, %arg1: memref<4x1x1024xf32, #tpu.memory_space<vmem>>, %arg2: memref<4x1x1280xf32, #tpu.memory_space<vmem>>, %arg3: memref<1x8x128xf32, #tpu.memory_space<vmem>>) attributes {dimension_semantics = [#tpu.dimension_semantics<parallel>], iteration_bounds = array<i64: 1>, scalar_prefetch = 0 : i64, scratch_operands = 0 : i64, tpu.core_type = #tpu.core_type<tc>, window_params = [{transform_indices = @transform_0, window_bounds = array<i64: 4, 1, 1024>}, {transform_indices = @transform_1, window_bounds = array<i64: 4, 1, 1280>}, {transform_indices = @transform_2, window_bounds = array<i64: 1, 8, 128>}]} {
    %c0 = arith.constant 0 : index
    %c0_0 = arith.constant 0 : index
    %c0_1 = arith.constant 0 : index
    %0 = vector.load %arg1[%c0, %c0_0, %c0_1] : memref<4x1x1024xf32, #tpu.memory_space<vmem>>, vector<4x1x1024xf32>
    %c0_2 = arith.constant 0 : index
    %c0_3 = arith.constant 0 : index
    %c0_4 = arith.constant 0 : index
    %1 = vector.load %arg2[%c0_2, %c0_3, %c0_4] : memref<4x1x1280xf32, #tpu.memory_space<vmem>>, vector<4x1x1024xf32>
    tpu.vector_store %arg2[%c0_2, %c0_3, %c0_4], %0 {strides = array<i32>} : memref<4x1x1280xf32, #tpu.memory_space<vmem>>, vector<4x1x1024xf32>,
    %cst = arith.constant dense<0.000000e+00> : vector<1x1024xf32>
    %2 = vector.multi_reduction <add>, %0, %cst [0] : vector<4x1x1024xf32> to vector<1x1024xf32>
    %3 = vector.shape_cast %2 : vector<1x1024xf32> to vector<1x1x1024xf32>
    %cst_5 = arith.constant 4.000000e+00 : f32
    %4 = vector.broadcast %cst_5 : f32 to vector<1x1x1024xf32>
    %5 = arith.divf %3, %4 : vector<1x1x1024xf32>
    %6 = vector.broadcast %5 : vector<1x1x1024xf32> to vector<4x1x1024xf32>
    %7 = arith.subf %0, %6 : vector<4x1x1024xf32>
    %8 = arith.mulf %7, %7 : vector<4x1x1024xf32>
    %cst_6 = arith.constant dense<0.000000e+00> : vector<1x1024xf32>
    %9 = vector.multi_reduction <add>, %8, %cst_6 [0] : vector<4x1x1024xf32> to vector<1x1024xf32>
    %cst_7 = arith.constant 0.333333343 : f32
    %10 = vector.broadcast %cst_7 : f32 to vector<1x1024xf32>
    %11 = arith.mulf %9, %10 : vector<1x1024xf32>
    %cst_8 = arith.constant 9.99999993E-9 : f32
    %12 = vector.broadcast %cst_8 : f32 to vector<1x1024xf32>
    %13 = arith.addf %11, %12 : vector<1x1024xf32>
    %14 = math.sqrt %13 : vector<1x1024xf32>
    %15 = vector.shape_cast %14 : vector<1x1024xf32> to vector<1x1x1024xf32>
    %cst_9 = arith.constant dense<0.000000e+00> : vector<1xf32>
    %16 = vector.multi_reduction <add>, %15, %cst_9 [1, 2] : vector<1x1x1024xf32> to vector<1xf32>
    %17 = vector.shape_cast %16 : vector<1xf32> to vector<1x1x1xf32>
    %18 = vector.extract %17[0, 0, 0] : f32 from vector<1x1x1xf32>
    %19 = vector.broadcast %18 : f32 to vector<1x8x128xf32>
    %c0_10 = arith.constant 0 : index
    %c0_11 = arith.constant 0 : index
    %c0_12 = arith.constant 0 : index
    %20 = vector.load %arg3[%c0_10, %c0_11, %c0_12] : memref<1x8x128xf32, #tpu.memory_space<vmem>>, vector<1x8x128xf32>
    tpu.vector_store %arg3[%c0_10, %c0_11, %c0_12], %19 {strides = array<i32>} : memref<1x8x128xf32, #tpu.memory_space<vmem>>, vector<1x8x128xf32>,
    return
  }
  func.func @transform_0(%arg0: i32) -> (i32, i32, i32) {
    %c0_i32 = arith.constant 0 : i32
    %c0_i32_0 = arith.constant 0 : i32
    %c0_i32_1 = arith.constant 0 : i32
    return %c0_i32, %arg0, %c0_i32_0 : i32, i32, i32
  }
  func.func @transform_1(%arg0: i32) -> (i32, i32, i32) {
    %c0_i32 = arith.constant 0 : i32
    %c0_i32_0 = arith.constant 0 : i32
    %c0_i32_1 = arith.constant 0 : i32
    return %c0_i32, %arg0, %c0_i32_0 : i32, i32, i32
  }
  func.func @transform_2(%arg0: i32) -> (i32, i32, i32) {
    %c0_i32 = arith.constant 0 : i32
    %c0_i32_0 = arith.constant 0 : i32
    %c0_i32_1 = arith.constant 0 : i32
    return %arg0, %c0_i32, %c0_i32_0 : i32, i32, i32
  }
}

</mosaic_0001>

<llo_original>
// kernel: _mbstd_impl.1
$region0: #{_mbstd_impl.1}
  #allocation0 [shape = 'u32[]', space=smem, size = 0x4, offset = 0x4, fixed_abs, tag = 'smem constant byte address 0x4 - core index']
  #allocation1 [shape = 'u32[144,128]{1,0:T(1,128)}', space=vmem, size = 0x12000, scoped, tag = 'internal scratch']
  #allocation2 [shape = 's32[1]{0}', space=sflag, size = 0x4, scoped, tag = 'scratch operand']
  #allocation3 [shape = 's32[]', space=sflag, size = 0x4, offset = 0, fixed_abs, tag = 'sflag constant byte address 0x0 - dummy sync flag']
  %s0 = inlined_call_operand.vmem [shape: f32[4,1,1024], index: 0, kind: input, shape index: {}]
  %s1 = inlined_call_operand.vmem [shape: f32[4,1,1280], index: 1, kind: output, shape index: {0}]
  %s2 = inlined_call_operand.vmem [shape: f32[1,8,128], index: 2, kind: output, shape index: {1}]
  %3 = xla_tuple %s1, %s2
  %s4 = sld [smem:[#allocation0]]
  $region56: #{_mbstd_impl.1} parent=0
    _
  %s6 = ssub.s32 1, %s4
  %s7 = scalar_select 0, %s6, %s4
  // Predicated region
  $region2: #{_mbstd_impl.1} parent=0 // pred_check
    _
  $region3: #{_mbstd_impl.1} parent=0 // pred_check_branch
    %9 = sbr.rel (0) target = $region5
  $region4: #{_mbstd_impl.1} parent=0 // pred_region
    _
  $region5: #{_mbstd_impl.1} parent=0 // pred_fallthru
    _
  %v10 = vld [vmem:[%s0] sm:$0xff]
  %v11 = vld [vmem:[%s0 + $0x8] sm:$0xff]
  %v12 = vld [vmem:[%s0 + $0x10] sm:$0xff]
  %v13 = vld [vmem:[%s0 + $0x18] sm:$0xff]
  %p15 = scmp.lt.u32.totalorder 8, 8
  %p16 = pneg %p15
  // Predicated region
  $region6: #{_mbstd_impl.1} parent=0 // pred_check
    _
  $region7: #{_mbstd_impl.1} parent=0 // pred_check_branch
    %18 = sbr.rel (%p15) target = $region9
  $region8: #{_mbstd_impl.1} parent=0 // pred_region
    %s40 = sand.u32 8, 7
    %p41 = scmp.eq.s32.totalorder %s40, 0
    // Predicated region
    $region21: #{_mbstd_impl.1} parent=8 // pred_check
      %p42 = pneg %p41
    $region22: #{_mbstd_impl.1} parent=8 // pred_check_branch
      %44 = sbr.rel (%p42) target = $region24
    $region23: #{_mbstd_impl.1} parent=8 // pred_region
      loop: start=0, step=1, limit=1
      $region25: #{_mbstd_impl.1} parent=23 // loop_pre_header
        _
      $region26: #{_mbstd_impl.1} parent=23 // loop_header
        %s46 = sphi 0, %s50
        %p47 = scmp.ge.s32.totalorder %s46, 1
        %s51 = sphi %s0, %s0
        %s52 = sphi %s1, %s1
      $region27: #{_mbstd_impl.1} parent=23 // loop_header_branch
        %49 = sbr.rel (%p47) target = $region31
      $region28: #{_mbstd_impl.1} parent=23 // loop_body
        %v53 = vld [vmem:[%s51] sm:$0xff]
        %54 = vst [vmem:[%s52] sm:$0xff] %v53
        %v55 = vld [vmem:[%s51 + $0x8] sm:$0xff]
        %56 = vst [vmem:[%s52 + $0xa] sm:$0xff] %v55
        %v57 = vld [vmem:[%s51 + $0x10] sm:$0xff]
        %58 = vst [vmem:[%s52 + $0x14] sm:$0xff] %v57
        %v59 = vld [vmem:[%s51 + $0x18] sm:$0xff]
        %60 = vst [vmem:[%s52 + $0x1e] sm:$0xff] %v59
      $region29: #{_mbstd_impl.1} parent=23 // loop_footer
        %s50 = sadd.s32 1, %s46
      $region30: #{_mbstd_impl.1} parent=23 // loop_footer_branch
        %45 = sbr.rel target = $region26
      $region31: #{_mbstd_impl.1} parent=23 // loop_exit
        _
    $region24: #{_mbstd_impl.1} parent=8 // pred_fallthru
      _
    %p61 = pneg %p41
    // Predicated region
    $region32: #{_mbstd_impl.1} parent=8 // pred_check
      _
    $region33: #{_mbstd_impl.1} parent=8 // pred_check_branch
      %63 = sbr.rel (%p41) target = $region35
    $region34: #{_mbstd_impl.1} parent=8 // pred_region
      %s64 = sand.u32 8, 7
    $region35: #{_mbstd_impl.1} parent=8 // pred_fallthru
      _
  $region9: #{_mbstd_impl.1} parent=0 // pred_fallthru
    _
  // Predicated region
  $region10: #{_mbstd_impl.1} parent=0 // pred_check
    %p19 = pneg %p15
  $region11: #{_mbstd_impl.1} parent=0 // pred_check_branch
    %21 = sbr.rel (%p19) target = $region13
  $region12: #{_mbstd_impl.1} parent=0 // pred_region
    %s22 = sshll.u32 1, 8
    %s23 = ssub.s32 %s22, 1
    loop: start=0, step=1, limit=1
    $region14: #{_mbstd_impl.1} parent=12 // loop_pre_header
      _
    $region15: #{_mbstd_impl.1} parent=12 // loop_header
      %s25 = sphi 0, %s29
      %p26 = scmp.ge.s32.totalorder %s25, 1
      %s30 = sphi %s0, %s0
      %s31 = sphi %s1, %s1
    $region16: #{_mbstd_impl.1} parent=12 // loop_header_branch
      %28 = sbr.rel (%p26) target = $region20
    $region17: #{_mbstd_impl.1} parent=12 // loop_body
      %v32 = vld [vmem:[%s30] sm:%s23]
      %33 = vst [vmem:[%s31] sm:%s23] %v32
      %v34 = vld [vmem:[%s30 + $0x8] sm:%s23]
      %35 = vst [vmem:[%s31 + $0xa] sm:%s23] %v34
      %v36 = vld [vmem:[%s30 + $0x10] sm:%s23]
      %37 = vst [vmem:[%s31 + $0x14] sm:%s23] %v36
      %v38 = vld [vmem:[%s30 + $0x18] sm:%s23]
      %39 = vst [vmem:[%s31 + $0x1e] sm:%s23] %v38
    $region18: #{_mbstd_impl.1} parent=12 // loop_footer
      %s29 = sadd.s32 1, %s25
    $region19: #{_mbstd_impl.1} parent=12 // loop_footer_branch
      %24 = sbr.rel target = $region15
    $region20: #{_mbstd_impl.1} parent=12 // loop_exit
      _
  $region13: #{_mbstd_impl.1} parent=0 // pred_fallthru
    _
  // Predicated region
  $region36: #{_mbstd_impl.1} parent=0 // pred_check
    _
  $region37: #{_mbstd_impl.1} parent=0 // pred_check_branch
    %67 = sbr.rel (0) target = $region39
  $region38: #{_mbstd_impl.1} parent=0 // pred_region
    %68 = vsyncadd [#allocation2], 512
  $region39: #{_mbstd_impl.1} parent=0 // pred_fallthru
    _
  %v73 = vlaneseq
  %v74 = vshrl.u32 %v73, 7
  %v75 = vsub.s32 0, %v74
  %v76 = vrot.slane %v10, %v75
  %v77 = vlaneseq
  %v78 = vshrl.u32 %v77, 7
  %v79 = vsub.s32 1, %v78
  %v80 = vrot.slane %v10, %v79
  %v81 = vlaneseq
  %v82 = vshrl.u32 %v81, 7
  %v83 = vsub.s32 2, %v82
  %v84 = vrot.slane %v10, %v83
  %v85 = vlaneseq
  %v86 = vshrl.u32 %v85, 7
  %v87 = vsub.s32 3, %v86
  %v88 = vrot.slane %v10, %v87
  %v89 = vlaneseq
  %v90 = vshrl.u32 %v89, 7
  %v91 = vsub.s32 4, %v90
  %v92 = vrot.slane %v10, %v91
  %v93 = vlaneseq
  %v94 = vshrl.u32 %v93, 7
  %v95 = vsub.s32 5, %v94
  %v96 = vrot.slane %v10, %v95
  %v97 = vlaneseq
  %v98 = vshrl.u32 %v97, 7
  %v99 = vsub.s32 6, %v98
  %v100 = vrot.slane %v10, %v99
  %v101 = vlaneseq
  %v102 = vshrl.u32 %v101, 7
  %v103 = vsub.s32 7, %v102
  %v104 = vrot.slane %v10, %v103
  %v105 = vlaneseq
  %v106 = vshrl.u32 %v105, 7
  %v107 = vsub.s32 0, %v106
  %v108 = vrot.slane %v11, %v107
  %v109 = vlaneseq
  %v110 = vshrl.u32 %v109, 7
  %v111 = vsub.s32 1, %v110
  %v112 = vrot.slane %v11, %v111
  %v113 = vlaneseq
  %v114 = vshrl.u32 %v113, 7
  %v115 = vsub.s32 2, %v114
  %v116 = vrot.slane %v11, %v115
  %v117 = vlaneseq
  %v118 = vshrl.u32 %v117, 7
  %v119 = vsub.s32 3, %v118
  %v120 = vrot.slane %v11, %v119
  %v121 = vlaneseq
  %v122 = vshrl.u32 %v121, 7
  %v123 = vsub.s32 4, %v122
  %v124 = vrot.slane %v11, %v123
  %v125 = vlaneseq
  %v126 = vshrl.u32 %v125, 7
  %v127 = vsub.s32 5, %v126
  %v128 = vrot.slane %v11, %v127
  %v129 = vlaneseq
  %v130 = vshrl.u32 %v129, 7
  %v131 = vsub.s32 6, %v130
  %v132 = vrot.slane %v11, %v131
  %v133 = vlaneseq
  %v134 = vshrl.u32 %v133, 7
  %v135 = vsub.s32 7, %v134
  %v136 = vrot.slane %v11, %v135
  %v137 = vlaneseq
  %v138 = vshrl.u32 %v137, 7
  %v139 = vsub.s32 0, %v138
  %v140 = vrot.slane %v12, %v139
  %v141 = vlaneseq
  %v142 = vshrl.u32 %v141, 7
  %v143 = vsub.s32 1, %v142
  %v144 = vrot.slane %v12, %v143
  %v145 = vlaneseq
  %v146 = vshrl.u32 %v145, 7
  %v147 = vsub.s32 2, %v146
  %v148 = vrot.slane %v12, %v147
  %v149 = vlaneseq
  %v150 = vshrl.u32 %v149, 7
  %v151 = vsub.s32 3, %v150
  %v152 = vrot.slane %v12, %v151
  %v153 = vlaneseq
  %v154 = vshrl.u32 %v153, 7
  %v155 = vsub.s32 4, %v154
  %v156 = vrot.slane %v12, %v155
  %v157 = vlaneseq
  %v158 = vshrl.u32 %v157, 7
  %v159 = vsub.s32 5, %v158
  %v160 = vrot.slane %v12, %v159
  %v161 = vlaneseq
  %v162 = vshrl.u32 %v161, 7
  %v163 = vsub.s32 6, %v162
  %v164 = vrot.slane %v12, %v163
  %v165 = vlaneseq
  %v166 = vshrl.u32 %v165, 7
  %v167 = vsub.s32 7, %v166
  %v168 = vrot.slane %v12, %v167
  %v169 = vlaneseq
  %v170 = vshrl.u32 %v169, 7
  %v171 = vsub.s32 0, %v170
  %v172 = vrot.slane %v13, %v171
  %v173 = vlaneseq
  %v174 = vshrl.u32 %v173, 7
  %v175 = vsub.s32 1, %v174
  %v176 = vrot.slane %v13, %v175
  %v177 = vlaneseq
  %v178 = vshrl.u32 %v177, 7
  %v179 = vsub.s32 2, %v178
  %v180 = vrot.slane %v13, %v179
  %v181 = vlaneseq
  %v182 = vshrl.u32 %v181, 7
  %v183 = vsub.s32 3, %v182
  %v184 = vrot.slane %v13, %v183
  %v185 = vlaneseq
  %v186 = vshrl.u32 %v185, 7
  %v187 = vsub.s32 4, %v186
  %v188 = vrot.slane %v13, %v187
  %v189 = vlaneseq
  %v190 = vshrl.u32 %v189, 7
  %v191 = vsub.s32 5, %v190
  %v192 = vrot.slane %v13, %v191
  %v193 = vlaneseq
  %v194 = vshrl.u32 %v193, 7
  %v195 = vsub.s32 6, %v194
  %v196 = vrot.slane %v13, %v195
  %v197 = vlaneseq
  %v198 = vshrl.u32 %v197, 7
  %v199 = vsub.s32 7, %v198
  %v200 = vrot.slane %v13, %v199
  %vm233 = vcmask 1040384
  %v234 = vsel %vm233, %v76, 0.0
  %v235 = vsel %vm233, %v108, 0.0
  %v236 = vadd.f32 %v234, %v235
  %v237 = vsel %vm233, %v140, 0.0
  %v238 = vadd.f32 %v236, %v237
  %v239 = vsel %vm233, %v172, 0.0
  %v240 = vadd.f32 %v238, %v239
  %v241 = vsel %vm233, %v80, 0.0
  %v242 = vsel %vm233, %v112, 0.0
  %v243 = vadd.f32 %v241, %v242
  %v244 = vsel %vm233, %v144, 0.0
  %v245 = vadd.f32 %v243, %v244
  %v246 = vsel %vm233, %v176, 0.0
  %v247 = vadd.f32 %v245, %v246
  %v248 = vsel %vm233, %v84, 0.0
  %v249 = vsel %vm233, %v116, 0.0
  %v250 = vadd.f32 %v248, %v249
  %v251 = vsel %vm233, %v148, 0.0
  %v252 = vadd.f32 %v250, %v251
  %v253 = vsel %vm233, %v180, 0.0
  %v254 = vadd.f32 %v252, %v253
  %v255 = vsel %vm233, %v88, 0.0
  %v256 = vsel %vm233, %v120, 0.0
  %v257 = vadd.f32 %v255, %v256
  %v258 = vsel %vm233, %v152, 0.0
  %v259 = vadd.f32 %v257, %v258
  %v260 = vsel %vm233, %v184, 0.0
  %v261 = vadd.f32 %v259, %v260
  %v262 = vsel %vm233, %v92, 0.0
  %v263 = vsel %vm233, %v124, 0.0
  %v264 = vadd.f32 %v262, %v263
  %v265 = vsel %vm233, %v156, 0.0
  %v266 = vadd.f32 %v264, %v265
  %v267 = vsel %vm233, %v188, 0.0
  %v268 = vadd.f32 %v266, %v267
  %v269 = vsel %vm233, %v96, 0.0
  %v270 = vsel %vm233, %v128, 0.0
  %v271 = vadd.f32 %v269, %v270
  %v272 = vsel %vm233, %v160, 0.0
  %v273 = vadd.f32 %v271, %v272
  %v274 = vsel %vm233, %v192, 0.0
  %v275 = vadd.f32 %v273, %v274
  %v276 = vsel %vm233, %v100, 0.0
  %v277 = vsel %vm233, %v132, 0.0
  %v278 = vadd.f32 %v276, %v277
  %v279 = vsel %vm233, %v164, 0.0
  %v280 = vadd.f32 %v278, %v279
  %v281 = vsel %vm233, %v196, 0.0
  %v282 = vadd.f32 %v280, %v281
  %v283 = vsel %vm233, %v104, 0.0
  %v284 = vsel %vm233, %v136, 0.0
  %v285 = vadd.f32 %v283, %v284
  %v286 = vsel %vm233, %v168, 0.0
  %v287 = vadd.f32 %v285, %v286
  %v288 = vsel %vm233, %v200, 0.0
  %v289 = vadd.f32 %v287, %v288
  %v290 = vrcp.pop 4.0
  %v291 = vmul.f32 %v240, %v290
  %v292 = vmul.f32 %v247, %v290
  %v293 = vmul.f32 %v254, %v290
  %v294 = vmul.f32 %v261, %v290
  %v295 = vmul.f32 %v268, %v290
  %v296 = vmul.f32 %v275, %v290
  %v297 = vmul.f32 %v282, %v290
  %v298 = vmul.f32 %v289, %v290
  %v307 = vcombine.low %v291, %v292
  %v308 = vcombine.low %v293, %v294
  %v309 = vcombine.low %v295, %v296
  %v310 = vcombine.low %v297, %v298
  %v312 = vunpack.c.l.s4 1966171168
  %v313 = vunpack.c.0.s8 %v312
  %v314 = vlaneseq
  %v315 = vshrl.u32 %v314, 7
  %v316 = vsub.s32 %v313, %v315
  %v317 = vrot.slane %v307, %v316
  %v319 = vunpack.c.l.s4 1966171168
  %v320 = vunpack.c.0.s8 %v319
  %v321 = vlaneseq
  %v322 = vshrl.u32 %v321, 7
  %v323 = vsub.s32 %v320, %v322
  %v324 = vrot.slane %v308, %v323
  %v326 = vunpack.c.l.s4 1966171168
  %v327 = vunpack.c.0.s8 %v326
  %v328 = vlaneseq
  %v329 = vshrl.u32 %v328, 7
  %v330 = vsub.s32 %v327, %v329
  %v331 = vrot.slane %v309, %v330
  %v333 = vunpack.c.l.s4 1966171168
  %v334 = vunpack.c.0.s8 %v333
  %v335 = vlaneseq
  %v336 = vshrl.u32 %v335, 7
  %v337 = vsub.s32 %v334, %v336
  %v338 = vrot.slane %v310, %v337
  %v339 = vcombine.low %v317, %v324
  %v340 = vcombine.low %v331, %v338
  %v342 = vunpack.c.l.s4 1966171168
  %v343 = vunpack.c.0.s8 %v342
  %v344 = vlaneseq
  %v345 = vshrl.u32 %v344, 7
  %v346 = vsub.s32 %v343, %v345
  %v347 = vrot.slane %v339, %v346
  %v349 = vunpack.c.l.s4 1966171168
  %v350 = vunpack.c.0.s8 %v349
  %v351 = vlaneseq
  %v352 = vshrl.u32 %v351, 7
  %v353 = vsub.s32 %v350, %v352
  %v354 = vrot.slane %v340, %v353
  %v355 = vcombine.low %v347, %v354
  %v357 = vsub.f32 %v10, %v355
  %v358 = vsub.f32 %v11, %v355
  %v359 = vsub.f32 %v12, %v355
  %v360 = vsub.f32 %v13, %v355
  %v361 = vmul.f32 %v357, %v357
  %v362 = vmul.f32 %v358, %v358
  %v363 = vmul.f32 %v359, %v359
  %v364 = vmul.f32 %v360, %v360
  %v369 = vlaneseq
  %v370 = vshrl.u32 %v369, 7
  %v371 = vsub.s32 0, %v370
  %v372 = vrot.slane %v361, %v371
  %v373 = vlaneseq
  %v374 = vshrl.u32 %v373, 7
  %v375 = vsub.s32 1, %v374
  %v376 = vrot.slane %v361, %v375
  %v377 = vlaneseq
  %v378 = vshrl.u32 %v377, 7
  %v379 = vsub.s32 2, %v378
  %v380 = vrot.slane %v361, %v379
  %v381 = vlaneseq
  %v382 = vshrl.u32 %v381, 7
  %v383 = vsub.s32 3, %v382
  %v384 = vrot.slane %v361, %v383
  %v385 = vlaneseq
  %v386 = vshrl.u32 %v385, 7
  %v387 = vsub.s32 4, %v386
  %v388 = vrot.slane %v361, %v387
  %v389 = vlaneseq
  %v390 = vshrl.u32 %v389, 7
  %v391 = vsub.s32 5, %v390
  %v392 = vrot.slane %v361, %v391
  %v393 = vlaneseq
  %v394 = vshrl.u32 %v393, 7
  %v395 = vsub.s32 6, %v394
  %v396 = vrot.slane %v361, %v395
  %v397 = vlaneseq
  %v398 = vshrl.u32 %v397, 7
  %v399 = vsub.s32 7, %v398
  %v400 = vrot.slane %v361, %v399
  %v401 = vlaneseq
  %v402 = vshrl.u32 %v401, 7
  %v403 = vsub.s32 0, %v402
  %v404 = vrot.slane %v362, %v403
  %v405 = vlaneseq
  %v406 = vshrl.u32 %v405, 7
  %v407 = vsub.s32 1, %v406
  %v408 = vrot.slane %v362, %v407
  %v409 = vlaneseq
  %v410 = vshrl.u32 %v409, 7
  %v411 = vsub.s32 2, %v410
  %v412 = vrot.slane %v362, %v411
  %v413 = vlaneseq
  %v414 = vshrl.u32 %v413, 7
  %v415 = vsub.s32 3, %v414
  %v416 = vrot.slane %v362, %v415
  %v417 = vlaneseq
  %v418 = vshrl.u32 %v417, 7
  %v419 = vsub.s32 4, %v418
  %v420 = vrot.slane %v362, %v419
  %v421 = vlaneseq
  %v422 = vshrl.u32 %v421, 7
  %v423 = vsub.s32 5, %v422
  %v424 = vrot.slane %v362, %v423
  %v425 = vlaneseq
  %v426 = vshrl.u32 %v425, 7
  %v427 = vsub.s32 6, %v426
  %v428 = vrot.slane %v362, %v427
  %v429 = vlaneseq
  %v430 = vshrl.u32 %v429, 7
  %v431 = vsub.s32 7, %v430
  %v432 = vrot.slane %v362, %v431
  %v433 = vlaneseq
  %v434 = vshrl.u32 %v433, 7
  %v435 = vsub.s32 0, %v434
  %v436 = vrot.slane %v363, %v435
  %v437 = vlaneseq
  %v438 = vshrl.u32 %v437, 7
  %v439 = vsub.s32 1, %v438
  %v440 = vrot.slane %v363, %v439
  %v441 = vlaneseq
  %v442 = vshrl.u32 %v441, 7
  %v443 = vsub.s32 2, %v442
  %v444 = vrot.slane %v363, %v443
  %v445 = vlaneseq
  %v446 = vshrl.u32 %v445, 7
  %v447 = vsub.s32 3, %v446
  %v448 = vrot.slane %v363, %v447
  %v449 = vlaneseq
  %v450 = vshrl.u32 %v449, 7
  %v451 = vsub.s32 4, %v450
  %v452 = vrot.slane %v363, %v451
  %v453 = vlaneseq
  %v454 = vshrl.u32 %v453, 7
  %v455 = vsub.s32 5, %v454
  %v456 = vrot.slane %v363, %v455
  %v457 = vlaneseq
  %v458 = vshrl.u32 %v457, 7
  %v459 = vsub.s32 6, %v458
  %v460 = vrot.slane %v363, %v459
  %v461 = vlaneseq
  %v462 = vshrl.u32 %v461, 7
  %v463 = vsub.s32 7, %v462
  %v464 = vrot.slane %v363, %v463
  %v465 = vlaneseq
  %v466 = vshrl.u32 %v465, 7
  %v467 = vsub.s32 0, %v466
  %v468 = vrot.slane %v364, %v467
  %v469 = vlaneseq
  %v470 = vshrl.u32 %v469, 7
  %v471 = vsub.s32 1, %v470
  %v472 = vrot.slane %v364, %v471
  %v473 = vlaneseq
  %v474 = vshrl.u32 %v473, 7
  %v475 = vsub.s32 2, %v474
  %v476 = vrot.slane %v364, %v475
  %v477 = vlaneseq
  %v478 = vshrl.u32 %v477, 7
  %v479 = vsub.s32 3, %v478
  %v480 = vrot.slane %v364, %v479
  %v481 = vlaneseq
  %v482 = vshrl.u32 %v481, 7
  %v483 = vsub.s32 4, %v482
  %v484 = vrot.slane %v364, %v483
  %v485 = vlaneseq
  %v486 = vshrl.u32 %v485, 7
  %v487 = vsub.s32 5, %v486
  %v488 = vrot.slane %v364, %v487
  %v489 = vlaneseq
  %v490 = vshrl.u32 %v489, 7
  %v491 = vsub.s32 6, %v490
  %v492 = vrot.slane %v364, %v491
  %v493 = vlaneseq
  %v494 = vshrl.u32 %v493, 7
  %v495 = vsub.s32 7, %v494
  %v496 = vrot.slane %v364, %v495
  %v529 = vsel %vm233, %v372, 0.0
  %v530 = vsel %vm233, %v404, 0.0
  %v531 = vadd.f32 %v529, %v530
  %v532 = vsel %vm233, %v436, 0.0
  %v533 = vadd.f32 %v531, %v532
  %v534 = vsel %vm233, %v468, 0.0
  %v535 = vadd.f32 %v533, %v534
  %v536 = vsel %vm233, %v376, 0.0
  %v537 = vsel %vm233, %v408, 0.0
  %v538 = vadd.f32 %v536, %v537
  %v539 = vsel %vm233, %v440, 0.0
  %v540 = vadd.f32 %v538, %v539
  %v541 = vsel %vm233, %v472, 0.0
  %v542 = vadd.f32 %v540, %v541
  %v543 = vsel %vm233, %v380, 0.0
  %v544 = vsel %vm233, %v412, 0.0
  %v545 = vadd.f32 %v543, %v544
  %v546 = vsel %vm233, %v444, 0.0
  %v547 = vadd.f32 %v545, %v546
  %v548 = vsel %vm233, %v476, 0.0
  %v549 = vadd.f32 %v547, %v548
  %v550 = vsel %vm233, %v384, 0.0
  %v551 = vsel %vm233, %v416, 0.0
  %v552 = vadd.f32 %v550, %v551
  %v553 = vsel %vm233, %v448, 0.0
  %v554 = vadd.f32 %v552, %v553
  %v555 = vsel %vm233, %v480, 0.0
  %v556 = vadd.f32 %v554, %v555
  %v557 = vsel %vm233, %v388, 0.0
  %v558 = vsel %vm233, %v420, 0.0
  %v559 = vadd.f32 %v557, %v558
  %v560 = vsel %vm233, %v452, 0.0
  %v561 = vadd.f32 %v559, %v560
  %v562 = vsel %vm233, %v484, 0.0
  %v563 = vadd.f32 %v561, %v562
  %v564 = vsel %vm233, %v392, 0.0
  %v565 = vsel %vm233, %v424, 0.0
  %v566 = vadd.f32 %v564, %v565
  %v567 = vsel %vm233, %v456, 0.0
  %v568 = vadd.f32 %v566, %v567
  %v569 = vsel %vm233, %v488, 0.0
  %v570 = vadd.f32 %v568, %v569
  %v571 = vsel %vm233, %v396, 0.0
  %v572 = vsel %vm233, %v428, 0.0
  %v573 = vadd.f32 %v571, %v572
  %v574 = vsel %vm233, %v460, 0.0
  %v575 = vadd.f32 %v573, %v574
  %v576 = vsel %vm233, %v492, 0.0
  %v577 = vadd.f32 %v575, %v576
  %v578 = vsel %vm233, %v400, 0.0
  %v579 = vsel %vm233, %v432, 0.0
  %v580 = vadd.f32 %v578, %v579
  %v581 = vsel %vm233, %v464, 0.0
  %v582 = vadd.f32 %v580, %v581
  %v583 = vsel %vm233, %v496, 0.0
  %v584 = vadd.f32 %v582, %v583
  %v585 = vmul.f32 %v535, 0.33333334
  %v586 = vmul.f32 %v542, 0.33333334
  %v587 = vmul.f32 %v549, 0.33333334
  %v588 = vmul.f32 %v556, 0.33333334
  %v589 = vmul.f32 %v563, 0.33333334
  %v590 = vmul.f32 %v570, 0.33333334
  %v591 = vmul.f32 %v577, 0.33333334
  %v592 = vmul.f32 %v584, 0.33333334
  %v593 = vadd.f32 %v585, 1e-08
  %v594 = vadd.f32 %v586, 1e-08
  %v595 = vadd.f32 %v587, 1e-08
  %v596 = vadd.f32 %v588, 1e-08
  %v597 = vadd.f32 %v589, 1e-08
  %v598 = vadd.f32 %v590, 1e-08
  %v599 = vadd.f32 %v591, 1e-08
  %v600 = vadd.f32 %v592, 1e-08
  %v601 = vrsqrt.pop %v593
  %v602 = vmul.f32 %v593, %v601
  %vm603 = vcmp.eq.f32.partialorder %v593, inf
  %v604 = vsel %vm603, %v593, %v602
  %vm605 = vcmp.eq.f32.partialorder %v593, 0.0
  %v606 = vand.u32 %v593, 2147483648
  %v607 = vsel %vm605, %v606, %v604
  %v608 = vrsqrt.pop %v594
  %v609 = vmul.f32 %v594, %v608
  %vm610 = vcmp.eq.f32.partialorder %v594, inf
  %v611 = vsel %vm610, %v594, %v609
  %vm612 = vcmp.eq.f32.partialorder %v594, 0.0
  %v613 = vand.u32 %v594, 2147483648
  %v614 = vsel %vm612, %v613, %v611
  %v615 = vrsqrt.pop %v595
  %v616 = vmul.f32 %v595, %v615
  %vm617 = vcmp.eq.f32.partialorder %v595, inf
  %v618 = vsel %vm617, %v595, %v616
  %vm619 = vcmp.eq.f32.partialorder %v595, 0.0
  %v620 = vand.u32 %v595, 2147483648
  %v621 = vsel %vm619, %v620, %v618
  %v622 = vrsqrt.pop %v596
  %v623 = vmul.f32 %v596, %v622
  %vm624 = vcmp.eq.f32.partialorder %v596, inf
  %v625 = vsel %vm624, %v596, %v623
  %vm626 = vcmp.eq.f32.partialorder %v596, 0.0
  %v627 = vand.u32 %v596, 2147483648
  %v628 = vsel %vm626, %v627, %v625
  %v629 = vrsqrt.pop %v597
  %v630 = vmul.f32 %v597, %v629
  %vm631 = vcmp.eq.f32.partialorder %v597, inf
  %v632 = vsel %vm631, %v597, %v630
  %vm633 = vcmp.eq.f32.partialorder %v597, 0.0
  %v634 = vand.u32 %v597, 2147483648
  %v635 = vsel %vm633, %v634, %v632
  %v636 = vrsqrt.pop %v598
  %v637 = vmul.f32 %v598, %v636
  %vm638 = vcmp.eq.f32.partialorder %v598, inf
  %v639 = vsel %vm638, %v598, %v637
  %vm640 = vcmp.eq.f32.partialorder %v598, 0.0
  %v641 = vand.u32 %v598, 2147483648
  %v642 = vsel %vm640, %v641, %v639
  %v643 = vrsqrt.pop %v599
  %v644 = vmul.f32 %v599, %v643
  %vm645 = vcmp.eq.f32.partialorder %v599, inf
  %v646 = vsel %vm645, %v599, %v644
  %vm647 = vcmp.eq.f32.partialorder %v599, 0.0
  %v648 = vand.u32 %v599, 2147483648
  %v649 = vsel %vm647, %v648, %v646
  %v650 = vrsqrt.pop %v600
  %v651 = vmul.f32 %v600, %v650
  %vm652 = vcmp.eq.f32.partialorder %v600, inf
  %v653 = vsel %vm652, %v600, %v651
  %vm654 = vcmp.eq.f32.partialorder %v600, 0.0
  %v655 = vand.u32 %v600, 2147483648
  %v656 = vsel %vm654, %v655, %v653
  %v657 = vsel %vm233, %v607, 0.0
  %v658 = vsel %vm233, %v614, 0.0
  %v659 = vadd.f32 %v657, %v658
  %v660 = vsel %vm233, %v621, 0.0
  %v661 = vadd.f32 %v659, %v660
  %v662 = vsel %vm233, %v628, 0.0
  %v663 = vadd.f32 %v661, %v662
  %v664 = vsel %vm233, %v635, 0.0
  %v665 = vadd.f32 %v663, %v664
  %v666 = vsel %vm233, %v642, 0.0
  %v667 = vadd.f32 %v665, %v666
  %v668 = vsel %vm233, %v649, 0.0
  %v669 = vadd.f32 %v667, %v668
  %v670 = vsel %vm233, %v656, 0.0
  %v671 = vadd.f32 %v669, %v670
  %672 = vadd.xlane.f32.xlu0 %v671
  %v673 = vpop.xlane.xlu0 %672
  %v674 = vrot.slane %v673, 4
  %v675 = vadd.f32 %v673, %v674
  %v676 = vrot.slane %v675, 2
  %v677 = vadd.f32 %v675, %v676
  %v678 = vrot.slane %v677, 1
  %v679 = vadd.f32 %v677, %v678
  %s680 = vtos %v679
  %v681 = vstv %s680
  %682 = vst [vmem:[%s2] sm:$0xff] %v681
  %s683 = smul.u32 4, 1
  %s684 = smul.u32 %s683, 8
  %s685 = sshll.u32 %s684, 4
  %686 = dma.done [#allocation2], %s685
  // Predicated region
  $region40: #{_mbstd_impl.1} parent=0 // pred_check
    _
  $region41: #{_mbstd_impl.1} parent=0 // pred_check_branch
    %688 = sbr.rel (0) target = $region43
  $region42: #{_mbstd_impl.1} parent=0 // pred_region
    _
  $region43: #{_mbstd_impl.1} parent=0 // pred_fallthru
    _
  // Predicated region
  $region44: #{_mbstd_impl.1} parent=0 // pred_check
    _
  $region45: #{_mbstd_impl.1} parent=0 // pred_check_branch
    %690 = sbr.rel (0) target = $region47
  $region46: #{_mbstd_impl.1} parent=0 // pred_region
    _
  $region47: #{_mbstd_impl.1} parent=0 // pred_fallthru
    _
  // Predicated region
  $region48: #{_mbstd_impl.1} parent=0 // pred_check
    _
  $region49: #{_mbstd_impl.1} parent=0 // pred_check_branch
    %692 = sbr.rel (0) target = $region51
  $region50: #{_mbstd_impl.1} parent=0 // pred_region
    _
  $region51: #{_mbstd_impl.1} parent=0 // pred_fallthru
    _
  // Predicated region
  $region52: #{_mbstd_impl.1} parent=0 // pred_check
    _
  $region53: #{_mbstd_impl.1} parent=0 // pred_check_branch
    %694 = sbr.rel (0) target = $region55
  $region54: #{_mbstd_impl.1} parent=0 // pred_region
    _
  $region55: #{_mbstd_impl.1} parent=0 // pred_fallthru
    _
  %695 = vsyncmov [#allocation2]
  %s696 = vpop.sfrf %695
  %p697 = scmp.eq.s32.totalorder %s696, 0
  %p698 = pneg %p697
  %700 = shalt.err (%p698)

// kernel: _mbstd_impl.1
$region0: #{_mbstd_impl.1}
  #allocation0 [shape = 'u32[]', space=smem, size = 0x4, offset = 0x4, fixed_abs, tag = 'smem constant byte address 0x4 - core index']
  #allocation1 [shape = 'u32[144,128]{1,0:T(1,128)}', space=vmem, size = 0x12000, scoped, tag = 'internal scratch']
  %s0 = inlined_call_operand.vmem [shape: f32[4,1,1024], index: 0, kind: input, shape index: {}]
  %s1 = inlined_call_operand.vmem [shape: f32[4,1,1280], index: 1, kind: output, shape index: {0}]
  %s2 = inlined_call_operand.vmem [shape: f32[1,8,128], index: 2, kind: output, shape index: {1}]
  %3 = xla_tuple %s1, %s2
  %s4 = sld [smem:[#allocation0]]
  $region22: #{_mbstd_impl.1} parent=0
    _
  %s6 = ssub.s32 1, %s4
  %s7 = scalar_select 0, %s6, %s4
  // Predicated region
  $region2: #{_mbstd_impl.1} parent=0 // pred_check
    _
  $region3: #{_mbstd_impl.1} parent=0 // pred_check_branch
    %9 = sbr.rel (0) target = $region5
  $region4: #{_mbstd_impl.1} parent=0 // pred_region
    _
  $region5: #{_mbstd_impl.1} parent=0 // pred_fallthru
    _
  %v10 = vld [vmem:[%s0] sm:$0xff]
  %v11 = vld [vmem:[%s0 + $0x8] sm:$0xff]
  %v12 = vld [vmem:[%s0 + $0x10] sm:$0xff]
  %v13 = vld [vmem:[%s0 + $0x18] sm:$0xff]
  %14 = vst [vmem:[%s1] sm:$0xff] %v10
  %15 = vst [vmem:[%s1 + $0xa] sm:$0xff] %v11
  %16 = vst [vmem:[%s1 + $0x14] sm:$0xff] %v12
  %17 = vst [vmem:[%s1 + $0x1e] sm:$0xff] %v13
  %v22 = vlaneseq
  %v23 = vshrl.u32 %v22, 7
  %v24 = vsub.s32 0, %v23
  %v25 = vrot.slane %v10, %v24
  %v26 = vlaneseq
  %v27 = vshrl.u32 %v26, 7
  %v28 = vsub.s32 1, %v27
  %v29 = vrot.slane %v10, %v28
  %v30 = vlaneseq
  %v31 = vshrl.u32 %v30, 7
  %v32 = vsub.s32 2, %v31
  %v33 = vrot.slane %v10, %v32
  %v34 = vlaneseq
  %v35 = vshrl.u32 %v34, 7
  %v36 = vsub.s32 3, %v35
  %v37 = vrot.slane %v10, %v36
  %v38 = vlaneseq
  %v39 = vshrl.u32 %v38, 7
  %v40 = vsub.s32 4, %v39
  %v41 = vrot.slane %v10, %v40
  %v42 = vlaneseq
  %v43 = vshrl.u32 %v42, 7
  %v44 = vsub.s32 5, %v43
  %v45 = vrot.slane %v10, %v44
  %v46 = vlaneseq
  %v47 = vshrl.u32 %v46, 7
  %v48 = vsub.s32 6, %v47
  %v49 = vrot.slane %v10, %v48
  %v50 = vlaneseq
  %v51 = vshrl.u32 %v50, 7
  %v52 = vsub.s32 7, %v51
  %v53 = vrot.slane %v10, %v52
  %v54 = vlaneseq
  %v55 = vshrl.u32 %v54, 7
  %v56 = vsub.s32 0, %v55
  %v57 = vrot.slane %v11, %v56
  %v58 = vlaneseq
  %v59 = vshrl.u32 %v58, 7
  %v60 = vsub.s32 1, %v59
  %v61 = vrot.slane %v11, %v60
  %v62 = vlaneseq
  %v63 = vshrl.u32 %v62, 7
  %v64 = vsub.s32 2, %v63
  %v65 = vrot.slane %v11, %v64
  %v66 = vlaneseq
  %v67 = vshrl.u32 %v66, 7
  %v68 = vsub.s32 3, %v67
  %v69 = vrot.slane %v11, %v68
  %v70 = vlaneseq
  %v71 = vshrl.u32 %v70, 7
  %v72 = vsub.s32 4, %v71
  %v73 = vrot.slane %v11, %v72
  %v74 = vlaneseq
  %v75 = vshrl.u32 %v74, 7
  %v76 = vsub.s32 5, %v75
  %v77 = vrot.slane %v11, %v76
  %v78 = vlaneseq
  %v79 = vshrl.u32 %v78, 7
  %v80 = vsub.s32 6, %v79
  %v81 = vrot.slane %v11, %v80
  %v82 = vlaneseq
  %v83 = vshrl.u32 %v82, 7
  %v84 = vsub.s32 7, %v83
  %v85 = vrot.slane %v11, %v84
  %v86 = vlaneseq
  %v87 = vshrl.u32 %v86, 7
  %v88 = vsub.s32 0, %v87
  %v89 = vrot.slane %v12, %v88
  %v90 = vlaneseq
  %v91 = vshrl.u32 %v90, 7
  %v92 = vsub.s32 1, %v91
  %v93 = vrot.slane %v12, %v92
  %v94 = vlaneseq
  %v95 = vshrl.u32 %v94, 7
  %v96 = vsub.s32 2, %v95
  %v97 = vrot.slane %v12, %v96
  %v98 = vlaneseq
  %v99 = vshrl.u32 %v98, 7
  %v100 = vsub.s32 3, %v99
  %v101 = vrot.slane %v12, %v100
  %v102 = vlaneseq
  %v103 = vshrl.u32 %v102, 7
  %v104 = vsub.s32 4, %v103
  %v105 = vrot.slane %v12, %v104
  %v106 = vlaneseq
  %v107 = vshrl.u32 %v106, 7
  %v108 = vsub.s32 5, %v107
  %v109 = vrot.slane %v12, %v108
  %v110 = vlaneseq
  %v111 = vshrl.u32 %v110, 7
  %v112 = vsub.s32 6, %v111
  %v113 = vrot.slane %v12, %v112
  %v114 = vlaneseq
  %v115 = vshrl.u32 %v114, 7
  %v116 = vsub.s32 7, %v115
  %v117 = vrot.slane %v12, %v116
  %v118 = vlaneseq
  %v119 = vshrl.u32 %v118, 7
  %v120 = vsub.s32 0, %v119
  %v121 = vrot.slane %v13, %v120
  %v122 = vlaneseq
  %v123 = vshrl.u32 %v122, 7
  %v124 = vsub.s32 1, %v123
  %v125 = vrot.slane %v13, %v124
  %v126 = vlaneseq
  %v127 = vshrl.u32 %v126, 7
  %v128 = vsub.s32 2, %v127
  %v129 = vrot.slane %v13, %v128
  %v130 = vlaneseq
  %v131 = vshrl.u32 %v130, 7
  %v132 = vsub.s32 3, %v131
  %v133 = vrot.slane %v13, %v132
  %v134 = vlaneseq
  %v135 = vshrl.u32 %v134, 7
  %v136 = vsub.s32 4, %v135
  %v137 = vrot.slane %v13, %v136
  %v138 = vlaneseq
  %v139 = vshrl.u32 %v138, 7
  %v140 = vsub.s32 5, %v139
  %v141 = vrot.slane %v13, %v140
  %v142 = vlaneseq
  %v143 = vshrl.u32 %v142, 7
  %v144 = vsub.s32 6, %v143
  %v145 = vrot.slane %v13, %v144
  %v146 = vlaneseq
  %v147 = vshrl.u32 %v146, 7
  %v148 = vsub.s32 7, %v147
  %v149 = vrot.slane %v13, %v148
  %vm182 = vcmask 1040384
  %v183 = vsel %vm182, %v25, 0.0
  %v184 = vsel %vm182, %v57, 0.0
  %v185 = vadd.f32 %v183, %v184
  %v186 = vsel %vm182, %v89, 0.0
  %v187 = vadd.f32 %v185, %v186
  %v188 = vsel %vm182, %v121, 0.0
  %v189 = vadd.f32 %v187, %v188
  %v190 = vsel %vm182, %v29, 0.0
  %v191 = vsel %vm182, %v61, 0.0
  %v192 = vadd.f32 %v190, %v191
  %v193 = vsel %vm182, %v93, 0.0
  %v194 = vadd.f32 %v192, %v193
  %v195 = vsel %vm182, %v125, 0.0
  %v196 = vadd.f32 %v194, %v195
  %v197 = vsel %vm182, %v33, 0.0
  %v198 = vsel %vm182, %v65, 0.0
  %v199 = vadd.f32 %v197, %v198
  %v200 = vsel %vm182, %v97, 0.0
  %v201 = vadd.f32 %v199, %v200
  %v202 = vsel %vm182, %v129, 0.0
  %v203 = vadd.f32 %v201, %v202
  %v204 = vsel %vm182, %v37, 0.0
  %v205 = vsel %vm182, %v69, 0.0
  %v206 = vadd.f32 %v204, %v205
  %v207 = vsel %vm182, %v101, 0.0
  %v208 = vadd.f32 %v206, %v207
  %v209 = vsel %vm182, %v133, 0.0
  %v210 = vadd.f32 %v208, %v209
  %v211 = vsel %vm182, %v41, 0.0
  %v212 = vsel %vm182, %v73, 0.0
  %v213 = vadd.f32 %v211, %v212
  %v214 = vsel %vm182, %v105, 0.0
  %v215 = vadd.f32 %v213, %v214
  %v216 = vsel %vm182, %v137, 0.0
  %v217 = vadd.f32 %v215, %v216
  %v218 = vsel %vm182, %v45, 0.0
  %v219 = vsel %vm182, %v77, 0.0
  %v220 = vadd.f32 %v218, %v219
  %v221 = vsel %vm182, %v109, 0.0
  %v222 = vadd.f32 %v220, %v221
  %v223 = vsel %vm182, %v141, 0.0
  %v224 = vadd.f32 %v222, %v223
  %v225 = vsel %vm182, %v49, 0.0
  %v226 = vsel %vm182, %v81, 0.0
  %v227 = vadd.f32 %v225, %v226
  %v228 = vsel %vm182, %v113, 0.0
  %v229 = vadd.f32 %v227, %v228
  %v230 = vsel %vm182, %v145, 0.0
  %v231 = vadd.f32 %v229, %v230
  %v232 = vsel %vm182, %v53, 0.0
  %v233 = vsel %vm182, %v85, 0.0
  %v234 = vadd.f32 %v232, %v233
  %v235 = vsel %vm182, %v117, 0.0
  %v236 = vadd.f32 %v234, %v235
  %v237 = vsel %vm182, %v149, 0.0
  %v238 = vadd.f32 %v236, %v237
  %v239 = vrcp.pop 4.0
  %v240 = vmul.f32 %v189, %v239
  %v241 = vmul.f32 %v196, %v239
  %v242 = vmul.f32 %v203, %v239
  %v243 = vmul.f32 %v210, %v239
  %v244 = vmul.f32 %v217, %v239
  %v245 = vmul.f32 %v224, %v239
  %v246 = vmul.f32 %v231, %v239
  %v247 = vmul.f32 %v238, %v239
  %v256 = vcombine.low %v240, %v241
  %v257 = vcombine.low %v242, %v243
  %v258 = vcombine.low %v244, %v245
  %v259 = vcombine.low %v246, %v247
  %v261 = vunpack.c.l.s4 1966171168
  %v262 = vunpack.c.0.s8 %v261
  %v263 = vlaneseq
  %v264 = vshrl.u32 %v263, 7
  %v265 = vsub.s32 %v262, %v264
  %v266 = vrot.slane %v256, %v265
  %v268 = vunpack.c.l.s4 1966171168
  %v269 = vunpack.c.0.s8 %v268
  %v270 = vlaneseq
  %v271 = vshrl.u32 %v270, 7
  %v272 = vsub.s32 %v269, %v271
  %v273 = vrot.slane %v257, %v272
  %v275 = vunpack.c.l.s4 1966171168
  %v276 = vunpack.c.0.s8 %v275
  %v277 = vlaneseq
  %v278 = vshrl.u32 %v277, 7
  %v279 = vsub.s32 %v276, %v278
  %v280 = vrot.slane %v258, %v279
  %v282 = vunpack.c.l.s4 1966171168
  %v283 = vunpack.c.0.s8 %v282
  %v284 = vlaneseq
  %v285 = vshrl.u32 %v284, 7
  %v286 = vsub.s32 %v283, %v285
  %v287 = vrot.slane %v259, %v286
  %v288 = vcombine.low %v266, %v273
  %v289 = vcombine.low %v280, %v287
  %v291 = vunpack.c.l.s4 1966171168
  %v292 = vunpack.c.0.s8 %v291
  %v293 = vlaneseq
  %v294 = vshrl.u32 %v293, 7
  %v295 = vsub.s32 %v292, %v294
  %v296 = vrot.slane %v288, %v295
  %v298 = vunpack.c.l.s4 1966171168
  %v299 = vunpack.c.0.s8 %v298
  %v300 = vlaneseq
  %v301 = vshrl.u32 %v300, 7
  %v302 = vsub.s32 %v299, %v301
  %v303 = vrot.slane %v289, %v302
  %v304 = vcombine.low %v296, %v303
  %v306 = vsub.f32 %v10, %v304
  %v307 = vsub.f32 %v11, %v304
  %v308 = vsub.f32 %v12, %v304
  %v309 = vsub.f32 %v13, %v304
  %v310 = vmul.f32 %v306, %v306
  %v311 = vmul.f32 %v307, %v307
  %v312 = vmul.f32 %v308, %v308
  %v313 = vmul.f32 %v309, %v309
  %v318 = vlaneseq
  %v319 = vshrl.u32 %v318, 7
  %v320 = vsub.s32 0, %v319
  %v321 = vrot.slane %v310, %v320
  %v322 = vlaneseq
  %v323 = vshrl.u32 %v322, 7
  %v324 = vsub.s32 1, %v323
  %v325 = vrot.slane %v310, %v324
  %v326 = vlaneseq
  %v327 = vshrl.u32 %v326, 7
  %v328 = vsub.s32 2, %v327
  %v329 = vrot.slane %v310, %v328
  %v330 = vlaneseq
  %v331 = vshrl.u32 %v330, 7
  %v332 = vsub.s32 3, %v331
  %v333 = vrot.slane %v310, %v332
  %v334 = vlaneseq
  %v335 = vshrl.u32 %v334, 7
  %v336 = vsub.s32 4, %v335
  %v337 = vrot.slane %v310, %v336
  %v338 = vlaneseq
  %v339 = vshrl.u32 %v338, 7
  %v340 = vsub.s32 5, %v339
  %v341 = vrot.slane %v310, %v340
  %v342 = vlaneseq
  %v343 = vshrl.u32 %v342, 7
  %v344 = vsub.s32 6, %v343
  %v345 = vrot.slane %v310, %v344
  %v346 = vlaneseq
  %v347 = vshrl.u32 %v346, 7
  %v348 = vsub.s32 7, %v347
  %v349 = vrot.slane %v310, %v348
  %v350 = vlaneseq
  %v351 = vshrl.u32 %v350, 7
  %v352 = vsub.s32 0, %v351
  %v353 = vrot.slane %v311, %v352
  %v354 = vlaneseq
  %v355 = vshrl.u32 %v354, 7
  %v356 = vsub.s32 1, %v355
  %v357 = vrot.slane %v311, %v356
  %v358 = vlaneseq
  %v359 = vshrl.u32 %v358, 7
  %v360 = vsub.s32 2, %v359
  %v361 = vrot.slane %v311, %v360
  %v362 = vlaneseq
  %v363 = vshrl.u32 %v362, 7
  %v364 = vsub.s32 3, %v363
  %v365 = vrot.slane %v311, %v364
  %v366 = vlaneseq
  %v367 = vshrl.u32 %v366, 7
  %v368 = vsub.s32 4, %v367
  %v369 = vrot.slane %v311, %v368
  %v370 = vlaneseq
  %v371 = vshrl.u32 %v370, 7
  %v372 = vsub.s32 5, %v371
  %v373 = vrot.slane %v311, %v372
  %v374 = vlaneseq
  %v375 = vshrl.u32 %v374, 7
  %v376 = vsub.s32 6, %v375
  %v377 = vrot.slane %v311, %v376
  %v378 = vlaneseq
  %v379 = vshrl.u32 %v378, 7
  %v380 = vsub.s32 7, %v379
  %v381 = vrot.slane %v311, %v380
  %v382 = vlaneseq
  %v383 = vshrl.u32 %v382, 7
  %v384 = vsub.s32 0, %v383
  %v385 = vrot.slane %v312, %v384
  %v386 = vlaneseq
  %v387 = vshrl.u32 %v386, 7
  %v388 = vsub.s32 1, %v387
  %v389 = vrot.slane %v312, %v388
  %v390 = vlaneseq
  %v391 = vshrl.u32 %v390, 7
  %v392 = vsub.s32 2, %v391
  %v393 = vrot.slane %v312, %v392
  %v394 = vlaneseq
  %v395 = vshrl.u32 %v394, 7
  %v396 = vsub.s32 3, %v395
  %v397 = vrot.slane %v312, %v396
  %v398 = vlaneseq
  %v399 = vshrl.u32 %v398, 7
  %v400 = vsub.s32 4, %v399
  %v401 = vrot.slane %v312, %v400
  %v402 = vlaneseq
  %v403 = vshrl.u32 %v402, 7
  %v404 = vsub.s32 5, %v403
  %v405 = vrot.slane %v312, %v404
  %v406 = vlaneseq
  %v407 = vshrl.u32 %v406, 7
  %v408 = vsub.s32 6, %v407
  %v409 = vrot.slane %v312, %v408
  %v410 = vlaneseq
  %v411 = vshrl.u32 %v410, 7
  %v412 = vsub.s32 7, %v411
  %v413 = vrot.slane %v312, %v412
  %v414 = vlaneseq
  %v415 = vshrl.u32 %v414, 7
  %v416 = vsub.s32 0, %v415
  %v417 = vrot.slane %v313, %v416
  %v418 = vlaneseq
  %v419 = vshrl.u32 %v418, 7
  %v420 = vsub.s32 1, %v419
  %v421 = vrot.slane %v313, %v420
  %v422 = vlaneseq
  %v423 = vshrl.u32 %v422, 7
  %v424 = vsub.s32 2, %v423
  %v425 = vrot.slane %v313, %v424
  %v426 = vlaneseq
  %v427 = vshrl.u32 %v426, 7
  %v428 = vsub.s32 3, %v427
  %v429 = vrot.slane %v313, %v428
  %v430 = vlaneseq
  %v431 = vshrl.u32 %v430, 7
  %v432 = vsub.s32 4, %v431
  %v433 = vrot.slane %v313, %v432
  %v434 = vlaneseq
  %v435 = vshrl.u32 %v434, 7
  %v436 = vsub.s32 5, %v435
  %v437 = vrot.slane %v313, %v436
  %v438 = vlaneseq
  %v439 = vshrl.u32 %v438, 7
  %v440 = vsub.s32 6, %v439
  %v441 = vrot.slane %v313, %v440
  %v442 = vlaneseq
  %v443 = vshrl.u32 %v442, 7
  %v444 = vsub.s32 7, %v443
  %v445 = vrot.slane %v313, %v444
  %v478 = vsel %vm182, %v321, 0.0
  %v479 = vsel %vm182, %v353, 0.0
  %v480 = vadd.f32 %v478, %v479
  %v481 = vsel %vm182, %v385, 0.0
  %v482 = vadd.f32 %v480, %v481
  %v483 = vsel %vm182, %v417, 0.0
  %v484 = vadd.f32 %v482, %v483
  %v485 = vsel %vm182, %v325, 0.0
  %v486 = vsel %vm182, %v357, 0.0
  %v487 = vadd.f32 %v485, %v486
  %v488 = vsel %vm182, %v389, 0.0
  %v489 = vadd.f32 %v487, %v488
  %v490 = vsel %vm182, %v421, 0.0
  %v491 = vadd.f32 %v489, %v490
  %v492 = vsel %vm182, %v329, 0.0
  %v493 = vsel %vm182, %v361, 0.0
  %v494 = vadd.f32 %v492, %v493
  %v495 = vsel %vm182, %v393, 0.0
  %v496 = vadd.f32 %v494, %v495
  %v497 = vsel %vm182, %v425, 0.0
  %v498 = vadd.f32 %v496, %v497
  %v499 = vsel %vm182, %v333, 0.0
  %v500 = vsel %vm182, %v365, 0.0
  %v501 = vadd.f32 %v499, %v500
  %v502 = vsel %vm182, %v397, 0.0
  %v503 = vadd.f32 %v501, %v502
  %v504 = vsel %vm182, %v429, 0.0
  %v505 = vadd.f32 %v503, %v504
  %v506 = vsel %vm182, %v337, 0.0
  %v507 = vsel %vm182, %v369, 0.0
  %v508 = vadd.f32 %v506, %v507
  %v509 = vsel %vm182, %v401, 0.0
  %v510 = vadd.f32 %v508, %v509
  %v511 = vsel %vm182, %v433, 0.0
  %v512 = vadd.f32 %v510, %v511
  %v513 = vsel %vm182, %v341, 0.0
  %v514 = vsel %vm182, %v373, 0.0
  %v515 = vadd.f32 %v513, %v514
  %v516 = vsel %vm182, %v405, 0.0
  %v517 = vadd.f32 %v515, %v516
  %v518 = vsel %vm182, %v437, 0.0
  %v519 = vadd.f32 %v517, %v518
  %v520 = vsel %vm182, %v345, 0.0
  %v521 = vsel %vm182, %v377, 0.0
  %v522 = vadd.f32 %v520, %v521
  %v523 = vsel %vm182, %v409, 0.0
  %v524 = vadd.f32 %v522, %v523
  %v525 = vsel %vm182, %v441, 0.0
  %v526 = vadd.f32 %v524, %v525
  %v527 = vsel %vm182, %v349, 0.0
  %v528 = vsel %vm182, %v381, 0.0
  %v529 = vadd.f32 %v527, %v528
  %v530 = vsel %vm182, %v413, 0.0
  %v531 = vadd.f32 %v529, %v530
  %v532 = vsel %vm182, %v445, 0.0
  %v533 = vadd.f32 %v531, %v532
  %v534 = vmul.f32 %v484, 0.33333334
  %v535 = vmul.f32 %v491, 0.33333334
  %v536 = vmul.f32 %v498, 0.33333334
  %v537 = vmul.f32 %v505, 0.33333334
  %v538 = vmul.f32 %v512, 0.33333334
  %v539 = vmul.f32 %v519, 0.33333334
  %v540 = vmul.f32 %v526, 0.33333334
  %v541 = vmul.f32 %v533, 0.33333334
  %v542 = vadd.f32 %v534, 1e-08
  %v543 = vadd.f32 %v535, 1e-08
  %v544 = vadd.f32 %v536, 1e-08
  %v545 = vadd.f32 %v537, 1e-08
  %v546 = vadd.f32 %v538, 1e-08
  %v547 = vadd.f32 %v539, 1e-08
  %v548 = vadd.f32 %v540, 1e-08
  %v549 = vadd.f32 %v541, 1e-08
  %v550 = vrsqrt.pop %v542
  %v551 = vmul.f32 %v542, %v550
  %vm552 = vcmp.eq.f32.partialorder %v542, inf
  %v553 = vsel %vm552, %v542, %v551
  %vm554 = vcmp.eq.f32.partialorder %v542, 0.0
  %v555 = vand.u32 %v542, 2147483648
  %v556 = vsel %vm554, %v555, %v553
  %v557 = vrsqrt.pop %v543
  %v558 = vmul.f32 %v543, %v557
  %vm559 = vcmp.eq.f32.partialorder %v543, inf
  %v560 = vsel %vm559, %v543, %v558
  %vm561 = vcmp.eq.f32.partialorder %v543, 0.0
  %v562 = vand.u32 %v543, 2147483648
  %v563 = vsel %vm561, %v562, %v560
  %v564 = vrsqrt.pop %v544
  %v565 = vmul.f32 %v544, %v564
  %vm566 = vcmp.eq.f32.partialorder %v544, inf
  %v567 = vsel %vm566, %v544, %v565
  %vm568 = vcmp.eq.f32.partialorder %v544, 0.0
  %v569 = vand.u32 %v544, 2147483648
  %v570 = vsel %vm568, %v569, %v567
  %v571 = vrsqrt.pop %v545
  %v572 = vmul.f32 %v545, %v571
  %vm573 = vcmp.eq.f32.partialorder %v545, inf
  %v574 = vsel %vm573, %v545, %v572
  %vm575 = vcmp.eq.f32.partialorder %v545, 0.0
  %v576 = vand.u32 %v545, 2147483648
  %v577 = vsel %vm575, %v576, %v574
  %v578 = vrsqrt.pop %v546
  %v579 = vmul.f32 %v546, %v578
  %vm580 = vcmp.eq.f32.partialorder %v546, inf
  %v581 = vsel %vm580, %v546, %v579
  %vm582 = vcmp.eq.f32.partialorder %v546, 0.0
  %v583 = vand.u32 %v546, 2147483648
  %v584 = vsel %vm582, %v583, %v581
  %v585 = vrsqrt.pop %v547
  %v586 = vmul.f32 %v547, %v585
  %vm587 = vcmp.eq.f32.partialorder %v547, inf
  %v588 = vsel %vm587, %v547, %v586
  %vm589 = vcmp.eq.f32.partialorder %v547, 0.0
  %v590 = vand.u32 %v547, 2147483648
  %v591 = vsel %vm589, %v590, %v588
  %v592 = vrsqrt.pop %v548
  %v593 = vmul.f32 %v548, %v592
  %vm594 = vcmp.eq.f32.partialorder %v548, inf
  %v595 = vsel %vm594, %v548, %v593
  %vm596 = vcmp.eq.f32.partialorder %v548, 0.0
  %v597 = vand.u32 %v548, 2147483648
  %v598 = vsel %vm596, %v597, %v595
  %v599 = vrsqrt.pop %v549
  %v600 = vmul.f32 %v549, %v599
  %vm601 = vcmp.eq.f32.partialorder %v549, inf
  %v602 = vsel %vm601, %v549, %v600
  %vm603 = vcmp.eq.f32.partialorder %v549, 0.0
  %v604 = vand.u32 %v549, 2147483648
  %v605 = vsel %vm603, %v604, %v602
  %v606 = vsel %vm182, %v556, 0.0
  %v607 = vsel %vm182, %v563, 0.0
  %v608 = vadd.f32 %v606, %v607
  %v609 = vsel %vm182, %v570, 0.0
  %v610 = vadd.f32 %v608, %v609
  %v611 = vsel %vm182, %v577, 0.0
  %v612 = vadd.f32 %v610, %v611
  %v613 = vsel %vm182, %v584, 0.0
  %v614 = vadd.f32 %v612, %v613
  %v615 = vsel %vm182, %v591, 0.0
  %v616 = vadd.f32 %v614, %v615
  %v617 = vsel %vm182, %v598, 0.0
  %v618 = vadd.f32 %v616, %v617
  %v619 = vsel %vm182, %v605, 0.0
  %v620 = vadd.f32 %v618, %v619
  %621 = vadd.xlane.f32.xlu0 %v620
  %v622 = vpop.xlane.xlu0 %621
  %v623 = vrot.slane %v622, 4
  %v624 = vadd.f32 %v622, %v623
  %v625 = vrot.slane %v624, 2
  %v626 = vadd.f32 %v624, %v625
  %v627 = vrot.slane %v626, 1
  %v628 = vadd.f32 %v626, %v627
  %s629 = vtos %v628
  %v630 = vstv %s629
  %631 = vst [vmem:[%s2] sm:$0xff] %v630
  // Predicated region
  $region6: #{_mbstd_impl.1} parent=0 // pred_check
    _
  $region7: #{_mbstd_impl.1} parent=0 // pred_check_branch
    %633 = sbr.rel (0) target = $region9
  $region8: #{_mbstd_impl.1} parent=0 // pred_region
    _
  $region9: #{_mbstd_impl.1} parent=0 // pred_fallthru
    _
  // Predicated region
  $region10: #{_mbstd_impl.1} parent=0 // pred_check
    _
  $region11: #{_mbstd_impl.1} parent=0 // pred_check_branch
    %635 = sbr.rel (0) target = $region13
  $region12: #{_mbstd_impl.1} parent=0 // pred_region
    _
  $region13: #{_mbstd_impl.1} parent=0 // pred_fallthru
    _
  // Predicated region
  $region14: #{_mbstd_impl.1} parent=0 // pred_check
    _
  $region15: #{_mbstd_impl.1} parent=0 // pred_check_branch
    %637 = sbr.rel (0) target = $region17
  $region16: #{_mbstd_impl.1} parent=0 // pred_region
    _
  $region17: #{_mbstd_impl.1} parent=0 // pred_fallthru
    _
  // Predicated region
  $region18: #{_mbstd_impl.1} parent=0 // pred_check
    _
  $region19: #{_mbstd_impl.1} parent=0 // pred_check_branch
    %639 = sbr.rel (0) target = $region21
  $region20: #{_mbstd_impl.1} parent=0 // pred_region
    _
  $region21: #{_mbstd_impl.1} parent=0 // pred_fallthru
    _

</llo_original>
